<compile_context>
chip_gen: v6e
topology: v6e:2x2x1
jax: 0.10.0
libtpu: 0.0.40
codegen_flags: <defaults>
</compile_context>

<pallas_src>
import functools

import jax
import jax.numpy as jnp
from jax.experimental import pallas as pl
from jax.experimental.pallas import tpu as pltpu

LANE = 128     # pad every channel dimension up to a multiple of this (lane-dense)
SUBLANE = 8    # pad the node dimension up to a multiple of this


def _round_up(n, m):
    return ((n + m - 1) // m) * m


# ----------------------------------------------------------------------------
# Fused kernel: all layers + log_softmax in one pallas_call
# ----------------------------------------------------------------------------
def _sage_fused_kernel(num_layers, out_channels, adj_ref, inv_deg_ref, x_ref, *refs):
    """refs = (W0, b0, W1, b1, ..., W_{L-1}, b_{L-1}, o_ref).

    W_i = [wl_i | wr_i] column-concatenated, zero-padded to (C_in_pad, 2*C_out_pad),
    stored in bf16, with eval-mode BatchNorm already folded into hidden wl/wr/b.
    Biases are f32.  adj is the raw binary adjacency in bf16; inv_deg is f32.
    """
    o_ref = refs[-1]
    w_refs = refs[:-1]

    adj = adj_ref[...]            # (Np, Np) bf16 raw binary adjacency
    inv_deg = inv_deg_ref[...]    # (Np, 1)  f32  1 / max(deg, 1)
    h = x_ref[...]                # (Np, C_pad) bf16 zero-padded node features

    for li in range(num_layers):
        w = w_refs[2 * li][...]          # bf16 (C_in_pad, 2 * C_out_pad)
        b = w_refs[2 * li + 1][...]      # f32  (1, C_out_pad)
        cp = b.shape[-1]                 # padded output width (static)

        # One fused bf16 projection matmul (f32 accumulation), then aggregate the
        # already-transformed features:  (adj @ (h @ wl)) * inv_deg + h @ wr + b.
        t = jnp.dot(h, w, preferred_element_type=jnp.float32)          # (Np, 2*cp) f32
        agg = jnp.dot(adj, t[:, :cp].astype(jnp.bfloat16),
                      preferred_element_type=jnp.float32)               # (Np, cp) f32
        hf = agg * inv_deg + t[:, cp:] + b                              # f32

        if li < num_layers - 1:
            # ReLU (BatchNorm already folded into w / b).  Padded lanes stay exactly 0.
            h = jnp.maximum(hf, 0.0).astype(jnp.bfloat16)
        else:
            h = hf  # keep the final logits in f32 for log_softmax

    # Numerically stable log_softmax over the valid class lanes only (f32).
    lane = jax.lax.broadcasted_iota(jnp.int32, h.shape, dimension=1)
    h = jnp.where(lane < out_channels, h, -1e30)
    m = jnp.max(h, axis=-1, keepdims=True)
    s = h - m
    lse = jnp.log(jnp.sum(jnp.exp(s), axis=-1, keepdims=True))
    o_ref[...] = s - lse


# ----------------------------------------------------------------------------
# Parameter construction / preparation
# ----------------------------------------------------------------------------
def init_sage_params(key, in_channels, hidden_channels, out_channels, num_layers):
    """Raw parameters matching the torch module (weights stored as [C_in, C_out])."""
    dims = [in_channels] + [hidden_channels] * (num_layers - 1) + [out_channels]
    layers, bns = [], []
    for li in range(num_layers):
        cin, cout = dims[li], dims[li + 1]
        key, k_wl, k_wr, k_b = jax.random.split(key, 4)
        scale = 1.0 / jnp.sqrt(jnp.float32(cin))
        layers.append(dict(
            wl=jax.random.normal(k_wl, (cin, cout), jnp.float32) * scale,
            wr=jax.random.normal(k_wr, (cin, cout), jnp.float32) * scale,
            b=jax.random.normal(k_b, (1, cout), jnp.float32) * scale,
        ))
        if li < num_layers - 1:
            # BatchNorm1d reset: gamma=1, beta=0, running mean=0, running var=1
            bns.append(dict(
                gamma=jnp.ones((1, cout), jnp.float32),
                beta=jnp.zeros((1, cout), jnp.float32),
                mean=jnp.zeros((1, cout), jnp.float32),
                var=jnp.ones((1, cout), jnp.float32),
            ))
    return dict(layers=layers, bns=bns)


def _prepare_fused_params(params):
    """Fold eval-mode BN into hidden layers, build padded [wl | wr] bf16 weights."""
    layers, bns = params["layers"], params["bns"]
    num_layers = len(layers)
    fused = []
    for li, layer in enumerate(layers):
        wl, wr, b = layer["wl"], layer["wr"], layer["b"]
        if li < num_layers - 1:
            bn = bns[li]
            s = bn["gamma"] * jax.lax.rsqrt(bn["var"] + 1e-5)     # (1, C_out)
            wl = wl * s
            wr = wr * s
            b = (b - bn["mean"]) * s + bn["beta"]
        cin, cout = wl.shape
        cin_p, cout_p = _round_up(cin, LANE), _round_up(cout, LANE)
        w_cat = jnp.zeros((cin_p, 2 * cout_p), jnp.float32)
        w_cat = w_cat.at[:cin, :cout].set(wl)
        w_cat = w_cat.at[:cin, cout_p:cout_p + cout].set(wr)
        b_pad = jnp.zeros((1, cout_p), jnp.float32).at[:, :cout].set(b)
        fused.append((w_cat.astype(jnp.bfloat16), b_pad))  # bias stays f32
    return fused


# ----------------------------------------------------------------------------
# pallas_call wrapper (whole graph resident: grid=(1,), full-array blocks)
# ----------------------------------------------------------------------------
def _full_spec(shape):
    nd = len(shape)
    return pl.BlockSpec(shape, lambda i, _nd=nd: (0,) * _nd)


def sage_forward(x, adj, params):
    """x: (N, in_channels) f32; adj: (N, N) dense binary adjacency (any float dtype)."""
    N, c_in = x.shape
    num_layers = len(params["layers"])
    out_channels = params["layers"][-1]["wl"].shape[1]
    out_pad = _round_up(out_channels, LANE)
    n_pad = _round_up(N, SUBLANE)

    # Raw binary adjacency in bf16 (0/1 are exact) + f32 inverse degree; the
    # mean-normalization happens inside the kernel, so no second NxN array is
    # materialized in HBM before the kernel runs.
    adj_b = adj.astype(jnp.bfloat16)
    deg = jnp.maximum(jnp.sum(adj.astype(jnp.float32), axis=-1, keepdims=True), 1.0)
    inv_deg = (1.0 / deg).astype(jnp.float32)

    if n_pad != N:
        # Padded rows/cols are zero => padded nodes never contribute to valid rows.
        adj_b = jnp.pad(adj_b, ((0, n_pad - N), (0, n_pad - N)))
        inv_deg = jnp.pad(inv_deg, ((0, n_pad - N), (0, 0)), constant_values=1.0)

    # BN folding + weight fusion + zero-padding to lane-dense widths (bf16 weights).
    fused = _prepare_fused_params(params)

    # Zero-pad input features to 128 lanes / 8 sublanes, cast to bf16.
    x_pad = jnp.pad(x.astype(jnp.bfloat16),
                    ((0, n_pad - N), (0, _round_up(c_in, LANE) - c_in)))

    arrays = [adj_b, inv_deg, x_pad]
    for w, b in fused:
        arrays += [w, b]

    out_shape = jax.ShapeDtypeStruct((n_pad, out_pad), jnp.float32)
    kernel = functools.partial(_sage_fused_kernel, num_layers, out_channels)

    # VMEM budget: double-buffered inputs + output + live f32 intermediate t + headroom.
    in_bytes = sum(int(a.size) * a.dtype.itemsize for a in arrays)
    t_bytes = 4 * n_pad * 2 * max(b.shape[-1] for _, b in fused)
    vmem_limit = int(min(64 * 1024 * 1024,
                         max(2 * in_bytes + 2 * 4 * n_pad * out_pad
                             + 4 * t_bytes + (4 << 20),
                             16 << 20)))

    out = pl.pallas_call(
        kernel,
        out_shape=out_shape,
        grid_spec=pltpu.PrefetchScalarGridSpec(
            num_scalar_prefetch=0,
            grid=(1,),
            in_specs=[_full_spec(a.shape) for a in arrays],
            out_specs=_full_spec(out_shape.shape),
        ),
        compiler_params=pltpu.CompilerParams(
            dimension_semantics=("arbitrary",),
            vmem_limit_bytes=vmem_limit),
    )(*arrays)

    return out[:N, :out_channels]


# ----------------------------------------------------------------------------
# Pure-JAX reference (unfused, unpadded, f32) for correctness checking
# ----------------------------------------------------------------------------
def reference_forward(x, adj, params):
    hi = jax.lax.Precision.HIGHEST
    deg = jnp.maximum(jnp.sum(adj, axis=-1, keepdims=True), 1.0)
    h = x
    num_layers = len(params["layers"])
    for li, layer in enumerate(params["layers"]):
        agg = jnp.dot(adj, h, precision=hi) / deg
        h = (jnp.dot(agg, layer["wl"], precision=hi)
             + jnp.dot(h, layer["wr"], precision=hi) + layer["b"])
        if li < num_layers - 1:
            bn = params["bns"][li]
            h = (h - bn["mean"]) * jax.lax.rsqrt(bn["var"] + 1e-5) * bn["gamma"] + bn["beta"]
            h = jnp.maximum(h, 0.0)
    m = jnp.max(h, axis=-1, keepdims=True)
    return (h - m) - jnp.log(jnp.sum(jnp.exp(h - m), axis=-1, keepdims=True))


# ----------------------------------------------------------------------------
# Main
# ----------------------------------------------------------------------------
if __name__ == "__main__":
    key = jax.random.PRNGKey(0)
    N = 16              # number of graph nodes
    in_channels = 8
    hidden_channels = 32
    out_channels = 8
    num_layers = 3
    dropout = 0.5       # inactive in eval mode

    k_x, k_adj, k_p = jax.random.split(key, 3)
    x = jax.random.normal(k_x, (N, in_channels), jnp.float32)
    # random binary adjacency with self-loops (dense stand-in for adj_t)
    adj = (jax.random.uniform(k_adj, (N, N)) < 0.3).astype(jnp.float32)
    adj = jnp.maximum(adj, jnp.eye(N, dtype=jnp.float32))

    params = init_sage_params(k_p, in_channels, hidden_channels,
                              out_channels, num_layers)

    out = sage_forward(x, adj, params)
    out = jax.block_until_ready(out)

    assert out.shape == (N, out_channels), out.shape
    # log_softmax rows should exponentiate-sum to ~1 (computed in f32 in-kernel)
    row_sums = jnp.exp(out).sum(axis=-1)
    assert bool(jnp.all(jnp.abs(row_sums - 1.0) < 1e-3)), row_sums

    # match the unfused / unpadded f32 reference (kernel runs bf16-in / f32-accum)
    ref = reference_forward(x, adj, params)
    max_err = float(jnp.max(jnp.abs(out - ref)))
    assert bool(jnp.allclose(out, ref, atol=5e-2, rtol=5e-2)), max_err

    print("KERNEL_OK")
</pallas_src>

<mosaic_0001>
module attributes {stable_mosaic.version = 11 : i64} {
  func.func @_sage_fused_kernel(%arg0: i32, %arg1: memref<16x16xbf16, #tpu.memory_space<vmem>>, %arg2: memref<16x1xf32, #tpu.memory_space<vmem>>, %arg3: memref<16x128xbf16, #tpu.memory_space<vmem>>, %arg4: memref<128x256xbf16, #tpu.memory_space<vmem>>, %arg5: memref<1x128xf32, #tpu.memory_space<vmem>>, %arg6: memref<128x256xbf16, #tpu.memory_space<vmem>>, %arg7: memref<1x128xf32, #tpu.memory_space<vmem>>, %arg8: memref<128x256xbf16, #tpu.memory_space<vmem>>, %arg9: memref<1x128xf32, #tpu.memory_space<vmem>>, %arg10: memref<16x128xf32, #tpu.memory_space<vmem>>) attributes {dimension_semantics = [#tpu.dimension_semantics<arbitrary>], iteration_bounds = array<i64: 1>, scalar_prefetch = 0 : i64, scratch_operands = 0 : i64, tpu.core_type = #tpu.core_type<tc>, window_params = [{pipeline_mode = #tpu.pipeline_mode<synchronous>, transform_indices = @transform_0, window_bounds = array<i64: 16, 16>}, {pipeline_mode = #tpu.pipeline_mode<synchronous>, transform_indices = @transform_1, window_bounds = array<i64: 16, 1>}, {pipeline_mode = #tpu.pipeline_mode<synchronous>, transform_indices = @transform_2, window_bounds = array<i64: 16, 128>}, {pipeline_mode = #tpu.pipeline_mode<synchronous>, transform_indices = @transform_3, window_bounds = array<i64: 128, 256>}, {pipeline_mode = #tpu.pipeline_mode<synchronous>, transform_indices = @transform_4, window_bounds = array<i64: 1, 128>}, {pipeline_mode = #tpu.pipeline_mode<synchronous>, transform_indices = @transform_5, window_bounds = array<i64: 128, 256>}, {pipeline_mode = #tpu.pipeline_mode<synchronous>, transform_indices = @transform_6, window_bounds = array<i64: 1, 128>}, {pipeline_mode = #tpu.pipeline_mode<synchronous>, transform_indices = @transform_7, window_bounds = array<i64: 128, 256>}, {pipeline_mode = #tpu.pipeline_mode<synchronous>, transform_indices = @transform_8, window_bounds = array<i64: 1, 128>}, {pipeline_mode = #tpu.pipeline_mode<synchronous>, transform_indices = @transform_9, window_bounds = array<i64: 16, 128>}]} {
    %c0 = arith.constant 0 : index
    %c0_0 = arith.constant 0 : index
    %0 = vector.load %arg1[%c0, %c0_0] : memref<16x16xbf16, #tpu.memory_space<vmem>>, vector<16x16xbf16>
    %c0_1 = arith.constant 0 : index
    %c0_2 = arith.constant 0 : index
    %1 = vector.load %arg2[%c0_1, %c0_2] : memref<16x1xf32, #tpu.memory_space<vmem>>, vector<16x1xf32>
    %c0_3 = arith.constant 0 : index
    %c0_4 = arith.constant 0 : index
    %2 = vector.load %arg3[%c0_3, %c0_4] : memref<16x128xbf16, #tpu.memory_space<vmem>>, vector<16x128xbf16>
    %c0_5 = arith.constant 0 : index
    %c0_6 = arith.constant 0 : index
    %3 = vector.load %arg4[%c0_5, %c0_6] : memref<128x256xbf16, #tpu.memory_space<vmem>>, vector<128x256xbf16>
    %c0_7 = arith.constant 0 : index
    %c0_8 = arith.constant 0 : index
    %4 = vector.load %arg5[%c0_7, %c0_8] : memref<1x128xf32, #tpu.memory_space<vmem>>, vector<1x128xf32>
    %cst = arith.constant dense<0.000000e+00> : vector<16x256xf32>
    %5 = tpu.matmul %2, %3, %cst {dimension_numbers = #tpu.dot_dimension_numbers<[1], [0], [0], [1], [0, 0, 1, 1], [], []>} : vector<16x128xbf16>, vector<128x256xbf16>, vector<16x256xf32> -> vector<16x256xf32>
    %6 = vector.extract_strided_slice %5 {offsets = [0, 0], sizes = [16, 128], strides = [1, 1]} : vector<16x256xf32> to vector<16x128xf32>
    %7 = arith.truncf %6 : vector<16x128xf32> to vector<16x128xbf16>
    %cst_9 = arith.constant dense<0.000000e+00> : vector<16x128xf32>
    %8 = tpu.matmul %0, %7, %cst_9 {dimension_numbers = #tpu.dot_dimension_numbers<[1], [0], [0], [1], [0, 0, 1, 1], [], []>} : vector<16x16xbf16>, vector<16x128xbf16>, vector<16x128xf32> -> vector<16x128xf32>
    %9 = vector.broadcast %1 : vector<16x1xf32> to vector<16x128xf32>
    %10 = arith.mulf %8, %9 : vector<16x128xf32>
    %11 = vector.extract_strided_slice %5 {offsets = [0, 128], sizes = [16, 128], strides = [1, 1]} : vector<16x256xf32> to vector<16x128xf32>
    %12 = arith.addf %10, %11 : vector<16x128xf32>
    %13 = vector.broadcast %4 : vector<1x128xf32> to vector<16x128xf32>
    %14 = arith.addf %12, %13 : vector<16x128xf32>
    %cst_10 = arith.constant 0.000000e+00 : f32
    %15 = vector.broadcast %cst_10 : f32 to vector<16x128xf32>
    %16 = arith.maximumf %14, %15 : vector<16x128xf32>
    %17 = arith.truncf %16 : vector<16x128xf32> to vector<16x128xbf16>
    %c0_11 = arith.constant 0 : index
    %c0_12 = arith.constant 0 : index
    %18 = vector.load %arg6[%c0_11, %c0_12] : memref<128x256xbf16, #tpu.memory_space<vmem>>, vector<128x256xbf16>
    %c0_13 = arith.constant 0 : index
    %c0_14 = arith.constant 0 : index
    %19 = vector.load %arg7[%c0_13, %c0_14] : memref<1x128xf32, #tpu.memory_space<vmem>>, vector<1x128xf32>
    %cst_15 = arith.constant dense<0.000000e+00> : vector<16x256xf32>
    %20 = tpu.matmul %17, %18, %cst_15 {dimension_numbers = #tpu.dot_dimension_numbers<[1], [0], [0], [1], [0, 0, 1, 1], [], []>} : vector<16x128xbf16>, vector<128x256xbf16>, vector<16x256xf32> -> vector<16x256xf32>
    %21 = vector.extract_strided_slice %20 {offsets = [0, 0], sizes = [16, 128], strides = [1, 1]} : vector<16x256xf32> to vector<16x128xf32>
    %22 = arith.truncf %21 : vector<16x128xf32> to vector<16x128xbf16>
    %cst_16 = arith.constant dense<0.000000e+00> : vector<16x128xf32>
    %23 = tpu.matmul %0, %22, %cst_16 {dimension_numbers = #tpu.dot_dimension_numbers<[1], [0], [0], [1], [0, 0, 1, 1], [], []>} : vector<16x16xbf16>, vector<16x128xbf16>, vector<16x128xf32> -> vector<16x128xf32>
    %24 = vector.broadcast %1 : vector<16x1xf32> to vector<16x128xf32>
    %25 = arith.mulf %23, %24 : vector<16x128xf32>
    %26 = vector.extract_strided_slice %20 {offsets = [0, 128], sizes = [16, 128], strides = [1, 1]} : vector<16x256xf32> to vector<16x128xf32>
    %27 = arith.addf %25, %26 : vector<16x128xf32>
    %28 = vector.broadcast %19 : vector<1x128xf32> to vector<16x128xf32>
    %29 = arith.addf %27, %28 : vector<16x128xf32>
    %cst_17 = arith.constant 0.000000e+00 : f32
    %30 = vector.broadcast %cst_17 : f32 to vector<16x128xf32>
    %31 = arith.maximumf %29, %30 : vector<16x128xf32>
    %32 = arith.truncf %31 : vector<16x128xf32> to vector<16x128xbf16>
    %c0_18 = arith.constant 0 : index
    %c0_19 = arith.constant 0 : index
    %33 = vector.load %arg8[%c0_18, %c0_19] : memref<128x256xbf16, #tpu.memory_space<vmem>>, vector<128x256xbf16>
    %c0_20 = arith.constant 0 : index
    %c0_21 = arith.constant 0 : index
    %34 = vector.load %arg9[%c0_20, %c0_21] : memref<1x128xf32, #tpu.memory_space<vmem>>, vector<1x128xf32>
    %cst_22 = arith.constant dense<0.000000e+00> : vector<16x256xf32>
    %35 = tpu.matmul %32, %33, %cst_22 {dimension_numbers = #tpu.dot_dimension_numbers<[1], [0], [0], [1], [0, 0, 1, 1], [], []>} : vector<16x128xbf16>, vector<128x256xbf16>, vector<16x256xf32> -> vector<16x256xf32>
    %36 = vector.extract_strided_slice %35 {offsets = [0, 0], sizes = [16, 128], strides = [1, 1]} : vector<16x256xf32> to vector<16x128xf32>
    %37 = arith.truncf %36 : vector<16x128xf32> to vector<16x128xbf16>
    %cst_23 = arith.constant dense<0.000000e+00> : vector<16x128xf32>
    %38 = tpu.matmul %0, %37, %cst_23 {dimension_numbers = #tpu.dot_dimension_numbers<[1], [0], [0], [1], [0, 0, 1, 1], [], []>} : vector<16x16xbf16>, vector<16x128xbf16>, vector<16x128xf32> -> vector<16x128xf32>
    %39 = vector.broadcast %1 : vector<16x1xf32> to vector<16x128xf32>
    %40 = arith.mulf %38, %39 : vector<16x128xf32>
    %41 = vector.extract_strided_slice %35 {offsets = [0, 128], sizes = [16, 128], strides = [1, 1]} : vector<16x256xf32> to vector<16x128xf32>
    %42 = arith.addf %40, %41 : vector<16x128xf32>
    %43 = vector.broadcast %34 : vector<1x128xf32> to vector<16x128xf32>
    %44 = arith.addf %42, %43 : vector<16x128xf32>
    %45 = tpu.iota {dimensions = array<i32: 1>} : vector<16x128xi32>
    %c8_i32 = arith.constant 8 : i32
    %46 = vector.broadcast %c8_i32 : i32 to vector<16x128xi32>
    %47 = arith.cmpi slt, %45, %46 : vector<16x128xi32>
    %cst_24 = arith.constant -1.000000e+30 : f32
    %48 = vector.broadcast %cst_24 : f32 to vector<16x128xf32>
    %49 = arith.select %47, %44, %48 : vector<16x128xi1>, vector<16x128xf32>
    %cst_25 = arith.constant dense<0xFF800000> : vector<16xf32>
    %50 = vector.multi_reduction <maximumf>, %49, %cst_25 [1] : vector<16x128xf32> to vector<16xf32>
    %51 = vector.shape_cast %50 : vector<16xf32> to vector<16x1xf32>
    %52 = vector.broadcast %51 : vector<16x1xf32> to vector<16x128xf32>
    %53 = arith.subf %49, %52 : vector<16x128xf32>
    %54 = math.exp %53 : vector<16x128xf32>
    %cst_26 = arith.constant dense<0.000000e+00> : vector<16xf32>
    %55 = vector.multi_reduction <add>, %54, %cst_26 [1] : vector<16x128xf32> to vector<16xf32>
    %56 = vector.shape_cast %55 : vector<16xf32> to vector<16x1xf32>
    %57 = math.log %56 : vector<16x1xf32>
    %58 = vector.broadcast %57 : vector<16x1xf32> to vector<16x128xf32>
    %59 = arith.subf %53, %58 : vector<16x128xf32>
    %c0_27 = arith.constant 0 : index
    %c0_28 = arith.constant 0 : index
    %60 = vector.load %arg10[%c0_27, %c0_28] : memref<16x128xf32, #tpu.memory_space<vmem>>, vector<16x128xf32>
    tpu.vector_store %arg10[%c0_27, %c0_28], %59 {strides = array<i32>} : memref<16x128xf32, #tpu.memory_space<vmem>>, vector<16x128xf32>,
    return
  }
  func.func @transform_0(%arg0: i32) -> (i32, i32) {
    %c0_i32 = arith.constant 0 : i32
    %c0_i32_0 = arith.constant 0 : i32
    %c0_i32_1 = arith.constant 0 : i32
    return %c0_i32, %c0_i32_0 : i32, i32
  }
  func.func @transform_1(%arg0: i32) -> (i32, i32) {
    %c0_i32 = arith.constant 0 : i32
    %c0_i32_0 = arith.constant 0 : i32
    %c0_i32_1 = arith.constant 0 : i32
    return %c0_i32, %c0_i32_0 : i32, i32
  }
  func.func @transform_2(%arg0: i32) -> (i32, i32) {
    %c0_i32 = arith.constant 0 : i32
    %c0_i32_0 = arith.constant 0 : i32
    %c0_i32_1 = arith.constant 0 : i32
    return %c0_i32, %c0_i32_0 : i32, i32
  }
  func.func @transform_3(%arg0: i32) -> (i32, i32) {
    %c0_i32 = arith.constant 0 : i32
    %c0_i32_0 = arith.constant 0 : i32
    %c0_i32_1 = arith.constant 0 : i32
    return %c0_i32, %c0_i32_0 : i32, i32
  }
  func.func @transform_4(%arg0: i32) -> (i32, i32) {
    %c0_i32 = arith.constant 0 : i32
    %c0_i32_0 = arith.constant 0 : i32
    %c0_i32_1 = arith.constant 0 : i32
    return %c0_i32, %c0_i32_0 : i32, i32
  }
  func.func @transform_5(%arg0: i32) -> (i32, i32) {
    %c0_i32 = arith.constant 0 : i32
    %c0_i32_0 = arith.constant 0 : i32
    %c0_i32_1 = arith.constant 0 : i32
    return %c0_i32, %c0_i32_0 : i32, i32
  }
  func.func @transform_6(%arg0: i32) -> (i32, i32) {
    %c0_i32 = arith.constant 0 : i32
    %c0_i32_0 = arith.constant 0 : i32
    %c0_i32_1 = arith.constant 0 : i32
    return %c0_i32, %c0_i32_0 : i32, i32
  }
  func.func @transform_7(%arg0: i32) -> (i32, i32) {
    %c0_i32 = arith.constant 0 : i32
    %c0_i32_0 = arith.constant 0 : i32
    %c0_i32_1 = arith.constant 0 : i32
    return %c0_i32, %c0_i32_0 : i32, i32
  }
  func.func @transform_8(%arg0: i32) -> (i32, i32) {
    %c0_i32 = arith.constant 0 : i32
    %c0_i32_0 = arith.constant 0 : i32
    %c0_i32_1 = arith.constant 0 : i32
    return %c0_i32, %c0_i32_0 : i32, i32
  }
  func.func @transform_9(%arg0: i32) -> (i32, i32) {
    %c0_i32 = arith.constant 0 : i32
    %c0_i32_0 = arith.constant 0 : i32
    %c0_i32_1 = arith.constant 0 : i32
    return %c0_i32, %c0_i32_0 : i32, i32
  }
}

</mosaic_0001>

<llo_original>
// kernel: tpu_custom_call.1
$region0: #{tpu_custom_call.1}
  #allocation0 [shape = 'u32[]', space=smem, size = 0x4, offset = 0x4, fixed_abs, tag = 'smem constant byte address 0x4 - core index']
  #allocation1 [shape = 'u32[144,128]{1,0:T(1,128)}', space=vmem, size = 0x12000, scoped, tag = 'internal scratch']
  %s0 = inlined_call_operand.vmem [shape: bf16[16,16], index: 0, kind: input, shape index: {}]
  %s1 = inlined_call_operand.vmem [shape: f32[16,1], index: 1, kind: input, shape index: {}]
  %s2 = inlined_call_operand.vmem [shape: bf16[16,128], index: 2, kind: input, shape index: {}]
  %s3 = inlined_call_operand.hbm [shape: bf16[128,256], index: 3, kind: input, shape index: {}]
  %s4 = inlined_call_operand.vmem [shape: f32[1,128], index: 4, kind: input, shape index: {}]
  %s5 = inlined_call_operand.hbm [shape: bf16[128,256], index: 5, kind: input, shape index: {}]
  %s6 = inlined_call_operand.vmem [shape: f32[1,128], index: 6, kind: input, shape index: {}]
  %s7 = inlined_call_operand.hbm [shape: bf16[128,256], index: 7, kind: input, shape index: {}]
  %s8 = inlined_call_operand.vmem [shape: f32[1,128], index: 8, kind: input, shape index: {}]
  %s9 = inlined_call_operand.hbm [shape: f32[16,128], index: 9, kind: output, shape index: {}]
  %s10 = sld [smem:[#allocation0]]
  $region58: #{tpu_custom_call.1} parent=0
    _
  %s12 = ssub.s32 1, %s10
  %s13 = scalar_select 0, %s12, %s10
  $region1: #{tpu_custom_call.1} parent=0
    #allocation2 [shape = 'u8[65536]{0}', space=vmem, size = 0x10000, scoped, tag = 'input window, operand 3, single buffered']
    #allocation3 [shape = 's32[1]{0}', space=sflag, size = 0x4, scoped, tag = 'scoped memory for tpu_custom_call.1']
    #allocation4 [shape = 's32[1]{0}', space=sflag, size = 0x4, scoped, tag = 'scoped memory for tpu_custom_call.1']
    #allocation5 [shape = 'u8[65536]{0}', space=vmem, size = 0x10000, scoped, tag = 'input window, operand 5, single buffered']
    #allocation6 [shape = 's32[1]{0}', space=sflag, size = 0x4, scoped, tag = 'scoped memory for tpu_custom_call.1']
    #allocation7 [shape = 'u8[65536]{0}', space=vmem, size = 0x10000, scoped, tag = 'input window, operand 7, single buffered']
    #allocation8 [shape = 'u8[8192]{0}', space=vmem, size = 0x2000, scoped, tag = 'output window, operand 0, single buffered']
    %14 = vsyncpa [#allocation3], 0
    %15 = vsyncpa [#allocation6], 0
    %16 = vsyncpa [#allocation4], 0
    // Predicated region
    $region2: #{tpu_custom_call.1} parent=1 // pred_check
      _
    $region3: #{tpu_custom_call.1} parent=1 // pred_check_branch
      %18 = sbr.rel (0) target = $region5
    $region4: #{tpu_custom_call.1} parent=1 // pred_region
      _
    $region5: #{tpu_custom_call.1} parent=1 // pred_fallthru
      _
    // Predicated region
    $region6: #{tpu_custom_call.1} parent=1 // pred_check
      _
    $region7: #{tpu_custom_call.1} parent=1 // pred_check_branch
      %20 = sbr.rel (0) target = $region9
    $region8: #{tpu_custom_call.1} parent=1 // pred_region
      _
    $region9: #{tpu_custom_call.1} parent=1 // pred_fallthru
      _
    // Predicated region
    $region10: #{tpu_custom_call.1} parent=1 // pred_check
      _
    $region11: #{tpu_custom_call.1} parent=1 // pred_check_branch
      %22 = sbr.rel (0) target = $region13
    $region12: #{tpu_custom_call.1} parent=1 // pred_region
      _
    $region13: #{tpu_custom_call.1} parent=1 // pred_fallthru
      _
    // Predicated region
    $region14: #{tpu_custom_call.1} parent=1 // pred_check
      _
    $region15: #{tpu_custom_call.1} parent=1 // pred_check_branch
      %24 = sbr.rel (0) target = $region17
    $region16: #{tpu_custom_call.1} parent=1 // pred_region
      %s26 = ssub.s32 2048, 2048
      %27 = vsyncadd [#allocation3], %s26
      %s28 = sshll.u32 [#allocation2], 4
      %s29 = int_to_ptr.vmem [resolvable:$true] %s28
      %34 = dma.hbm_to_vmem [thread:$0]  %s3, 2048, %s29, [#allocation3], 128, 128, 8
    $region17: #{tpu_custom_call.1} parent=1 // pred_fallthru
      _
    // Predicated region
    $region18: #{tpu_custom_call.1} parent=1 // pred_check
      _
    $region19: #{tpu_custom_call.1} parent=1 // pred_check_branch
      %36 = sbr.rel (0) target = $region21
    $region20: #{tpu_custom_call.1} parent=1 // pred_region
      _
    $region21: #{tpu_custom_call.1} parent=1 // pred_fallthru
      _
    // Predicated region
    $region22: #{tpu_custom_call.1} parent=1 // pred_check
      _
    $region23: #{tpu_custom_call.1} parent=1 // pred_check_branch
      %38 = sbr.rel (0) target = $region25
    $region24: #{tpu_custom_call.1} parent=1 // pred_region
      %s40 = ssub.s32 2048, 2048
      %41 = vsyncadd [#allocation6], %s40
      %s42 = sshll.u32 [#allocation5], 4
      %s43 = int_to_ptr.vmem [resolvable:$true] %s42
      %48 = dma.hbm_to_vmem [thread:$0]  %s5, 2048, %s43, [#allocation6], 128, 128, 8
    $region25: #{tpu_custom_call.1} parent=1 // pred_fallthru
      _
    // Predicated region
    $region26: #{tpu_custom_call.1} parent=1 // pred_check
      _
    $region27: #{tpu_custom_call.1} parent=1 // pred_check_branch
      %50 = sbr.rel (0) target = $region29
    $region28: #{tpu_custom_call.1} parent=1 // pred_region
      _
    $region29: #{tpu_custom_call.1} parent=1 // pred_fallthru
      _
    // Predicated region
    $region30: #{tpu_custom_call.1} parent=1 // pred_check
      _
    $region31: #{tpu_custom_call.1} parent=1 // pred_check_branch
      %52 = sbr.rel (0) target = $region33
    $region32: #{tpu_custom_call.1} parent=1 // pred_region
      %s54 = ssub.s32 2048, 2048
      %55 = vsyncadd [#allocation6], %s54
      %s56 = sshll.u32 [#allocation7], 4
      %s57 = int_to_ptr.vmem [resolvable:$true] %s56
      %62 = dma.hbm_to_vmem [thread:$0]  %s7, 2048, %s57, [#allocation6], 128, 128, 8
    $region33: #{tpu_custom_call.1} parent=1 // pred_fallthru
      _
    // Predicated region
    $region34: #{tpu_custom_call.1} parent=1 // pred_check
      _
    $region35: #{tpu_custom_call.1} parent=1 // pred_check_branch
      %64 = sbr.rel (0) target = $region37
    $region36: #{tpu_custom_call.1} parent=1 // pred_region
      _
    $region37: #{tpu_custom_call.1} parent=1 // pred_fallthru
      _
    // Predicated region
    $region38: #{tpu_custom_call.1} parent=1 // pred_check
      _
    $region39: #{tpu_custom_call.1} parent=1 // pred_check_branch
      %66 = sbr.rel (0) target = $region41
    $region40: #{tpu_custom_call.1} parent=1 // pred_region
      %67 = dma.done [#allocation3], 2048
    $region41: #{tpu_custom_call.1} parent=1 // pred_fallthru
      _
    // Predicated region
    $region42: #{tpu_custom_call.1} parent=1 // pred_check
      _
    $region43: #{tpu_custom_call.1} parent=1 // pred_check_branch
      %69 = sbr.rel (0) target = $region45
    $region44: #{tpu_custom_call.1} parent=1 // pred_region
      %70 = dma.done [#allocation6], 2048
    $region45: #{tpu_custom_call.1} parent=1 // pred_fallthru
      _
    // Predicated region
    $region46: #{tpu_custom_call.1} parent=1 // pred_check
      _
    $region47: #{tpu_custom_call.1} parent=1 // pred_check_branch
      %72 = sbr.rel (0) target = $region49
    $region48: #{tpu_custom_call.1} parent=1 // pred_region
      %73 = dma.done [#allocation6], 2048
    $region49: #{tpu_custom_call.1} parent=1 // pred_fallthru
      _
    %v75 = vld [vmem:[%s0] sm:$0xf]
    %v76 = vld [vmem:[%s0 + $0x4] sm:$0xf]
    %v77 = vld [vmem:[%s1] sm:$0xff]
    %v78 = vld [vmem:[%s1 + $0x8] sm:$0xff]
    %v79 = vld [vmem:[%s2] sm:$0xf]
    %v80 = vld [vmem:[%s2 + $0x4] sm:$0xf]
    %v81 = vld [vmem:[#allocation2] sm:$0xff]
    %v82 = vld [vmem:[#allocation2 + $0x8] sm:$0xff]
    %v83 = vld [vmem:[#allocation2 + $0x10] sm:$0xff]
    %v84 = vld [vmem:[#allocation2 + $0x18] sm:$0xff]
    %v85 = vld [vmem:[#allocation2 + $0x20] sm:$0xff]
    %v86 = vld [vmem:[#allocation2 + $0x28] sm:$0xff]
    %v87 = vld [vmem:[#allocation2 + $0x30] sm:$0xff]
    %v88 = vld [vmem:[#allocation2 + $0x38] sm:$0xff]
    %v89 = vld [vmem:[#allocation2 + $0x40] sm:$0xff]
    %v90 = vld [vmem:[#allocation2 + $0x48] sm:$0xff]
    %v91 = vld [vmem:[#allocation2 + $0x50] sm:$0xff]
    %v92 = vld [vmem:[#allocation2 + $0x58] sm:$0xff]
    %v93 = vld [vmem:[#allocation2 + $0x60] sm:$0xff]
    %v94 = vld [vmem:[#allocation2 + $0x68] sm:$0xff]
    %v95 = vld [vmem:[#allocation2 + $0x70] sm:$0xff]
    %v96 = vld [vmem:[#allocation2 + $0x78] sm:$0xff]
    %v97 = vld [vmem:[%s4] sm:$0x1]
    %v100 = vunpack.c.l.b16 %v79
    %v101 = vunpack.c.l.b16 %v80
    %v102 = vpack.c.b16 %v101, %v100
    %v120 = vunpack.c.l.b16 %v81
    %v121 = vunpack.c.h.b16 %v81
    %v122 = vunpack.c.l.b16 %v82
    %v123 = vunpack.c.h.b16 %v82
    %v124 = vunpack.c.l.b16 %v83
    %v125 = vunpack.c.h.b16 %v83
    %v126 = vunpack.c.l.b16 %v84
    %v127 = vunpack.c.h.b16 %v84
    %v128 = vunpack.c.l.b16 %v85
    %v129 = vunpack.c.h.b16 %v85
    %v130 = vunpack.c.l.b16 %v86
    %v131 = vunpack.c.h.b16 %v86
    %v132 = vunpack.c.l.b16 %v87
    %v133 = vunpack.c.h.b16 %v87
    %v134 = vunpack.c.l.b16 %v88
    %v135 = vunpack.c.h.b16 %v88
    %v136 = vunpack.c.l.b16 %v89
    %v137 = vunpack.c.h.b16 %v89
    %v138 = vunpack.c.l.b16 %v90
    %v139 = vunpack.c.h.b16 %v90
    %v140 = vunpack.c.l.b16 %v91
    %v141 = vunpack.c.h.b16 %v91
    %v142 = vunpack.c.l.b16 %v92
    %v143 = vunpack.c.h.b16 %v92
    %v144 = vunpack.c.l.b16 %v93
    %v145 = vunpack.c.h.b16 %v93
    %v146 = vunpack.c.l.b16 %v94
    %v147 = vunpack.c.h.b16 %v94
    %v148 = vunpack.c.l.b16 %v95
    %v149 = vunpack.c.h.b16 %v95
    %v150 = vunpack.c.l.b16 %v96
    %v151 = vunpack.c.h.b16 %v96
    %v152 = vpack.c.b16 %v122, %v120
    %v153 = vpack.c.b16 %v123, %v121
    %v154 = vpack.c.b16 %v126, %v124
    %v155 = vpack.c.b16 %v127, %v125
    %v156 = vpack.c.b16 %v130, %v128
    %v157 = vpack.c.b16 %v131, %v129
    %v158 = vpack.c.b16 %v134, %v132
    %v159 = vpack.c.b16 %v135, %v133
    %v160 = vpack.c.b16 %v138, %v136
    %v161 = vpack.c.b16 %v139, %v137
    %v162 = vpack.c.b16 %v142, %v140
    %v163 = vpack.c.b16 %v143, %v141
    %v164 = vpack.c.b16 %v146, %v144
    %v165 = vpack.c.b16 %v147, %v145
    %v166 = vpack.c.b16 %v150, %v148
    %v167 = vpack.c.b16 %v151, %v149
    %184 = vmatprep.subr.bf16.mxu0 %v167
    %185 = vmatpush1.bf16.msra.mxu0 %v166
    %186 = vmatprep.subr.bf16.mxu0 %v165
    %187 = vmatpush1.bf16.msra.mxu0 %v164
    %188 = vmatprep.subr.bf16.mxu0 %v163
    %189 = vmatpush1.bf16.msra.mxu0 %v162
    %190 = vmatprep.subr.bf16.mxu0 %v161
    %191 = vmatpush1.bf16.msra.mxu0 %v160
    %192 = vmatprep.subr.bf16.mxu0 %v159
    %193 = vmatpush1.bf16.msra.mxu0 %v158
    %194 = vmatprep.subr.bf16.mxu0 %v157
    %195 = vmatpush1.bf16.msra.mxu0 %v156
    %196 = vmatprep.subr.bf16.mxu0 %v155
    %197 = vmatpush1.bf16.msra.mxu0 %v154
    %198 = vmatprep.subr.bf16.mxu0 %v153
    %199 = vmatpush1.bf16.msra.mxu0 %v152
    %200 = vmatprep.subr.bf16.mxu0 0
    %201 = vmatpush2.bf16.msra.mxu0 0
    %202 = vmatprep.subr.bf16.mxu0 0
    %203 = vmatpush2.bf16.msra.mxu0 0
    %204 = vmatprep.subr.bf16.mxu0 0
    %205 = vmatpush2.bf16.msra.mxu0 0
    %206 = vmatprep.subr.bf16.mxu0 0
    %207 = vmatpush2.bf16.msra.mxu0 0
    %208 = vmatprep.subr.bf16.mxu0 0
    %209 = vmatpush2.bf16.msra.mxu0 0
    %210 = vmatprep.subr.bf16.mxu0 0
    %211 = vmatpush2.bf16.msra.mxu0 0
    %212 = vmatprep.subr.bf16.mxu0 0
    %213 = vmatpush2.bf16.msra.mxu0 0
    %214 = vmatprep.subr.bf16.mxu0 0
    %215 = vmatpush2.bf16.msra.mxu0 0
    %216 = vmatprep.mubr.bf16.mxu0 0
    %217 = vmatmul.mubr.bf16.gmra.mxu0 %v102
    %v218 = vpop.f32.mrf.mxu0
    %v219 = vadd.f32 0.0, %v218
    %v220 = vpop.f32.mrf.mxu0
    %v221 = vadd.f32 0.0, %v220
    %v222 = vpop.f32.mrf.mxu0
    %v223 = vadd.f32 0.0, %v222
    %v224 = vpop.f32.mrf.mxu0
    %v225 = vadd.f32 0.0, %v224
    %226 = vdwg.mxu0
    %v227 = vpack.c.bf16 %v223, %v219
    %v230 = vunpack.c.l.b16 %v75
    %v231 = vunpack.c.l.b16 %v76
    %v232 = vpack.c.b16 %v231, %v230
    %vm233 = vcmask 130048
    %v235 = vsel %vm233, %v232, 0
    %237 = vmatprep.subr.bf16.mxu0 0
    %238 = vmatpush1.bf16.msra.mxu0 0
    %239 = vmatprep.subr.bf16.mxu0 0
    %240 = vmatpush1.bf16.msra.mxu0 0
    %241 = vmatprep.subr.bf16.mxu0 0
    %242 = vmatpush1.bf16.msra.mxu0 0
    %243 = vmatprep.subr.bf16.mxu0 0
    %244 = vmatpush1.bf16.msra.mxu0 0
    %245 = vmatprep.subr.bf16.mxu0 0
    %246 = vmatpush1.bf16.msra.mxu0 0
    %247 = vmatprep.subr.bf16.mxu0 0
    %248 = vmatpush1.bf16.msra.mxu0 0
    %249 = vmatprep.subr.bf16.mxu0 0
    %250 = vmatpush1.bf16.msra.mxu0 0
    %251 = vmatprep.subr.bf16.mxu0 0
    %252 = vmatpush1.bf16.msra.mxu0 %v227
    %253 = vmatprep.subr.bf16.mxu0 0
    %254 = vmatpush2.bf16.msra.mxu0 0
    %255 = vmatprep.subr.bf16.mxu0 0
    %256 = vmatpush2.bf16.msra.mxu0 0
    %257 = vmatprep.subr.bf16.mxu0 0
    %258 = vmatpush2.bf16.msra.mxu0 0
    %259 = vmatprep.subr.bf16.mxu0 0
    %260 = vmatpush2.bf16.msra.mxu0 0
    %261 = vmatprep.subr.bf16.mxu0 0
    %262 = vmatpush2.bf16.msra.mxu0 0
    %263 = vmatprep.subr.bf16.mxu0 0
    %264 = vmatpush2.bf16.msra.mxu0 0
    %265 = vmatprep.subr.bf16.mxu0 0
    %266 = vmatpush2.bf16.msra.mxu0 0
    %267 = vmatprep.subr.bf16.mxu0 0
    %268 = vmatpush2.bf16.msra.mxu0 0
    %269 = vmatprep.mubr.bf16.mxu0 0
    %270 = vmatmul.mubr.bf16.gmra.mxu0 %v235
    %v271 = vpop.f32.mrf.mxu0
    %v272 = vadd.f32 0.0, %v271
    %v273 = vpop.f32.mrf.mxu0
    %v274 = vpop.f32.mrf.mxu0
    %v275 = vadd.f32 0.0, %v274
    %v276 = vpop.f32.mrf.mxu0
    %277 = vdwg.mxu0
    %279 = vset.pattern.permute.xlu0 0
    %280 = vperm.xlu0 %279, %v77
    %v281 = vpop.permute.xlu0 %280
    %284 = vset.pattern.permute.xlu0 0
    %285 = vperm.xlu0 %284, %v78
    %v286 = vpop.permute.xlu0 %285
    %v288 = vmul.f32 %v272, %v281
    %v289 = vmul.f32 %v275, %v286
    %v290 = vadd.f32 %v288, %v221
    %v291 = vadd.f32 %v289, %v225
    %v293 = vlaneseq
    %v294 = vshrl.u32 %v293, 7
    %v295 = vsub.s32 0, %v294
    %v296 = vrot.slane %v97, %v295
    %v298 = vadd.f32 %v290, %v296
    %v299 = vadd.f32 %v291, %v296
    %v300 = vmax.f32 %v298, 0.0
    %v301 = vmax.f32 %v299, 0.0
    %v302 = vpack.c.bf16 %v301, %v300
    %v303 = vld [vmem:[#allocation5] sm:$0xff]
    %v304 = vld [vmem:[#allocation5 + $0x8] sm:$0xff]
    %v305 = vld [vmem:[#allocation5 + $0x10] sm:$0xff]
    %v306 = vld [vmem:[#allocation5 + $0x18] sm:$0xff]
    %v307 = vld [vmem:[#allocation5 + $0x20] sm:$0xff]
    %v308 = vld [vmem:[#allocation5 + $0x28] sm:$0xff]
    %v309 = vld [vmem:[#allocation5 + $0x30] sm:$0xff]
    %v310 = vld [vmem:[#allocation5 + $0x38] sm:$0xff]
    %v311 = vld [vmem:[#allocation5 + $0x40] sm:$0xff]
    %v312 = vld [vmem:[#allocation5 + $0x48] sm:$0xff]
    %v313 = vld [vmem:[#allocation5 + $0x50] sm:$0xff]
    %v314 = vld [vmem:[#allocation5 + $0x58] sm:$0xff]
    %v315 = vld [vmem:[#allocation5 + $0x60] sm:$0xff]
    %v316 = vld [vmem:[#allocation5 + $0x68] sm:$0xff]
    %v317 = vld [vmem:[#allocation5 + $0x70] sm:$0xff]
    %v318 = vld [vmem:[#allocation5 + $0x78] sm:$0xff]
    %v319 = vld [vmem:[%s6] sm:$0x1]
    %v336 = vunpack.c.l.b16 %v303
    %v337 = vunpack.c.h.b16 %v303
    %v338 = vunpack.c.l.b16 %v304
    %v339 = vunpack.c.h.b16 %v304
    %v340 = vunpack.c.l.b16 %v305
    %v341 = vunpack.c.h.b16 %v305
    %v342 = vunpack.c.l.b16 %v306
    %v343 = vunpack.c.h.b16 %v306
    %v344 = vunpack.c.l.b16 %v307
    %v345 = vunpack.c.h.b16 %v307
    %v346 = vunpack.c.l.b16 %v308
    %v347 = vunpack.c.h.b16 %v308
    %v348 = vunpack.c.l.b16 %v309
    %v349 = vunpack.c.h.b16 %v309
    %v350 = vunpack.c.l.b16 %v310
    %v351 = vunpack.c.h.b16 %v310
    %v352 = vunpack.c.l.b16 %v311
    %v353 = vunpack.c.h.b16 %v311
    %v354 = vunpack.c.l.b16 %v312
    %v355 = vunpack.c.h.b16 %v312
    %v356 = vunpack.c.l.b16 %v313
    %v357 = vunpack.c.h.b16 %v313
    %v358 = vunpack.c.l.b16 %v314
    %v359 = vunpack.c.h.b16 %v314
    %v360 = vunpack.c.l.b16 %v315
    %v361 = vunpack.c.h.b16 %v315
    %v362 = vunpack.c.l.b16 %v316
    %v363 = vunpack.c.h.b16 %v316
    %v364 = vunpack.c.l.b16 %v317
    %v365 = vunpack.c.h.b16 %v317
    %v366 = vunpack.c.l.b16 %v318
    %v367 = vunpack.c.h.b16 %v318
    %v368 = vpack.c.b16 %v338, %v336
    %v369 = vpack.c.b16 %v339, %v337
    %v370 = vpack.c.b16 %v342, %v340
    %v371 = vpack.c.b16 %v343, %v341
    %v372 = vpack.c.b16 %v346, %v344
    %v373 = vpack.c.b16 %v347, %v345
    %v374 = vpack.c.b16 %v350, %v348
    %v375 = vpack.c.b16 %v351, %v349
    %v376 = vpack.c.b16 %v354, %v352
    %v377 = vpack.c.b16 %v355, %v353
    %v378 = vpack.c.b16 %v358, %v356
    %v379 = vpack.c.b16 %v359, %v357
    %v380 = vpack.c.b16 %v362, %v360
    %v381 = vpack.c.b16 %v363, %v361
    %v382 = vpack.c.b16 %v366, %v364
    %v383 = vpack.c.b16 %v367, %v365
    %400 = vmatprep.subr.bf16.mxu0 %v383
    %401 = vmatpush1.bf16.msra.mxu0 %v382
    %402 = vmatprep.subr.bf16.mxu0 %v381
    %403 = vmatpush1.bf16.msra.mxu0 %v380
    %404 = vmatprep.subr.bf16.mxu0 %v379
    %405 = vmatpush1.bf16.msra.mxu0 %v378
    %406 = vmatprep.subr.bf16.mxu0 %v377
    %407 = vmatpush1.bf16.msra.mxu0 %v376
    %408 = vmatprep.subr.bf16.mxu0 %v375
    %409 = vmatpush1.bf16.msra.mxu0 %v374
    %410 = vmatprep.subr.bf16.mxu0 %v373
    %411 = vmatpush1.bf16.msra.mxu0 %v372
    %412 = vmatprep.subr.bf16.mxu0 %v371
    %413 = vmatpush1.bf16.msra.mxu0 %v370
    %414 = vmatprep.subr.bf16.mxu0 %v369
    %415 = vmatpush1.bf16.msra.mxu0 %v368
    %416 = vmatprep.subr.bf16.mxu0 0
    %417 = vmatpush2.bf16.msra.mxu0 0
    %418 = vmatprep.subr.bf16.mxu0 0
    %419 = vmatpush2.bf16.msra.mxu0 0
    %420 = vmatprep.subr.bf16.mxu0 0
    %421 = vmatpush2.bf16.msra.mxu0 0
    %422 = vmatprep.subr.bf16.mxu0 0
    %423 = vmatpush2.bf16.msra.mxu0 0
    %424 = vmatprep.subr.bf16.mxu0 0
    %425 = vmatpush2.bf16.msra.mxu0 0
    %426 = vmatprep.subr.bf16.mxu0 0
    %427 = vmatpush2.bf16.msra.mxu0 0
    %428 = vmatprep.subr.bf16.mxu0 0
    %429 = vmatpush2.bf16.msra.mxu0 0
    %430 = vmatprep.subr.bf16.mxu0 0
    %431 = vmatpush2.bf16.msra.mxu0 0
    %432 = vmatprep.mubr.bf16.mxu0 0
    %433 = vmatmul.mubr.bf16.gmra.mxu0 %v302
    %v434 = vpop.f32.mrf.mxu0
    %v435 = vadd.f32 0.0, %v434
    %v436 = vpop.f32.mrf.mxu0
    %v437 = vadd.f32 0.0, %v436
    %v438 = vpop.f32.mrf.mxu0
    %v439 = vadd.f32 0.0, %v438
    %v440 = vpop.f32.mrf.mxu0
    %v441 = vadd.f32 0.0, %v440
    %442 = vdwg.mxu0
    %v443 = vpack.c.bf16 %v439, %v435
    %444 = vmatprep.subr.bf16.mxu0 0
    %445 = vmatpush1.bf16.msra.mxu0 0
    %446 = vmatprep.subr.bf16.mxu0 0
    %447 = vmatpush1.bf16.msra.mxu0 0
    %448 = vmatprep.subr.bf16.mxu0 0
    %449 = vmatpush1.bf16.msra.mxu0 0
    %450 = vmatprep.subr.bf16.mxu0 0
    %451 = vmatpush1.bf16.msra.mxu0 0
    %452 = vmatprep.subr.bf16.mxu0 0
    %453 = vmatpush1.bf16.msra.mxu0 0
    %454 = vmatprep.subr.bf16.mxu0 0
    %455 = vmatpush1.bf16.msra.mxu0 0
    %456 = vmatprep.subr.bf16.mxu0 0
    %457 = vmatpush1.bf16.msra.mxu0 0
    %458 = vmatprep.subr.bf16.mxu0 0
    %459 = vmatpush1.bf16.msra.mxu0 %v443
    %460 = vmatprep.subr.bf16.mxu0 0
    %461 = vmatpush2.bf16.msra.mxu0 0
    %462 = vmatprep.subr.bf16.mxu0 0
    %463 = vmatpush2.bf16.msra.mxu0 0
    %464 = vmatprep.subr.bf16.mxu0 0
    %465 = vmatpush2.bf16.msra.mxu0 0
    %466 = vmatprep.subr.bf16.mxu0 0
    %467 = vmatpush2.bf16.msra.mxu0 0
    %468 = vmatprep.subr.bf16.mxu0 0
    %469 = vmatpush2.bf16.msra.mxu0 0
    %470 = vmatprep.subr.bf16.mxu0 0
    %471 = vmatpush2.bf16.msra.mxu0 0
    %472 = vmatprep.subr.bf16.mxu0 0
    %473 = vmatpush2.bf16.msra.mxu0 0
    %474 = vmatprep.subr.bf16.mxu0 0
    %475 = vmatpush2.bf16.msra.mxu0 0
    %476 = vmatprep.mubr.bf16.mxu0 0
    %477 = vmatmul.mubr.bf16.gmra.mxu0 %v235
    %v478 = vpop.f32.mrf.mxu0
    %v479 = vadd.f32 0.0, %v478
    %v480 = vpop.f32.mrf.mxu0
    %v481 = vpop.f32.mrf.mxu0
    %v482 = vadd.f32 0.0, %v481
    %v483 = vpop.f32.mrf.mxu0
    %484 = vdwg.mxu0
    %v485 = vmul.f32 %v479, %v281
    %v486 = vmul.f32 %v482, %v286
    %v487 = vadd.f32 %v485, %v437
    %v488 = vadd.f32 %v486, %v441
    %v490 = vlaneseq
    %v491 = vshrl.u32 %v490, 7
    %v492 = vsub.s32 0, %v491
    %v493 = vrot.slane %v319, %v492
    %v495 = vadd.f32 %v487, %v493
    %v496 = vadd.f32 %v488, %v493
    %v497 = vmax.f32 %v495, 0.0
    %v498 = vmax.f32 %v496, 0.0
    %v499 = vpack.c.bf16 %v498, %v497
    %v500 = vld [vmem:[#allocation7] sm:$0xff]
    %v501 = vld [vmem:[#allocation7 + $0x8] sm:$0xff]
    %v502 = vld [vmem:[#allocation7 + $0x10] sm:$0xff]
    %v503 = vld [vmem:[#allocation7 + $0x18] sm:$0xff]
    %v504 = vld [vmem:[#allocation7 + $0x20] sm:$0xff]
    %v505 = vld [vmem:[#allocation7 + $0x28] sm:$0xff]
    %v506 = vld [vmem:[#allocation7 + $0x30] sm:$0xff]
    %v507 = vld [vmem:[#allocation7 + $0x38] sm:$0xff]
    %v508 = vld [vmem:[#allocation7 + $0x40] sm:$0xff]
    %v509 = vld [vmem:[#allocation7 + $0x48] sm:$0xff]
    %v510 = vld [vmem:[#allocation7 + $0x50] sm:$0xff]
    %v511 = vld [vmem:[#allocation7 + $0x58] sm:$0xff]
    %v512 = vld [vmem:[#allocation7 + $0x60] sm:$0xff]
    %v513 = vld [vmem:[#allocation7 + $0x68] sm:$0xff]
    %v514 = vld [vmem:[#allocation7 + $0x70] sm:$0xff]
    %v515 = vld [vmem:[#allocation7 + $0x78] sm:$0xff]
    %v516 = vld [vmem:[%s8] sm:$0x1]
    %v533 = vunpack.c.l.b16 %v500
    %v534 = vunpack.c.h.b16 %v500
    %v535 = vunpack.c.l.b16 %v501
    %v536 = vunpack.c.h.b16 %v501
    %v537 = vunpack.c.l.b16 %v502
    %v538 = vunpack.c.h.b16 %v502
    %v539 = vunpack.c.l.b16 %v503
    %v540 = vunpack.c.h.b16 %v503
    %v541 = vunpack.c.l.b16 %v504
    %v542 = vunpack.c.h.b16 %v504
    %v543 = vunpack.c.l.b16 %v505
    %v544 = vunpack.c.h.b16 %v505
    %v545 = vunpack.c.l.b16 %v506
    %v546 = vunpack.c.h.b16 %v506
    %v547 = vunpack.c.l.b16 %v507
    %v548 = vunpack.c.h.b16 %v507
    %v549 = vunpack.c.l.b16 %v508
    %v550 = vunpack.c.h.b16 %v508
    %v551 = vunpack.c.l.b16 %v509
    %v552 = vunpack.c.h.b16 %v509
    %v553 = vunpack.c.l.b16 %v510
    %v554 = vunpack.c.h.b16 %v510
    %v555 = vunpack.c.l.b16 %v511
    %v556 = vunpack.c.h.b16 %v511
    %v557 = vunpack.c.l.b16 %v512
    %v558 = vunpack.c.h.b16 %v512
    %v559 = vunpack.c.l.b16 %v513
    %v560 = vunpack.c.h.b16 %v513
    %v561 = vunpack.c.l.b16 %v514
    %v562 = vunpack.c.h.b16 %v514
    %v563 = vunpack.c.l.b16 %v515
    %v564 = vunpack.c.h.b16 %v515
    %v565 = vpack.c.b16 %v535, %v533
    %v566 = vpack.c.b16 %v536, %v534
    %v567 = vpack.c.b16 %v539, %v537
    %v568 = vpack.c.b16 %v540, %v538
    %v569 = vpack.c.b16 %v543, %v541
    %v570 = vpack.c.b16 %v544, %v542
    %v571 = vpack.c.b16 %v547, %v545
    %v572 = vpack.c.b16 %v548, %v546
    %v573 = vpack.c.b16 %v551, %v549
    %v574 = vpack.c.b16 %v552, %v550
    %v575 = vpack.c.b16 %v555, %v553
    %v576 = vpack.c.b16 %v556, %v554
    %v577 = vpack.c.b16 %v559, %v557
    %v578 = vpack.c.b16 %v560, %v558
    %v579 = vpack.c.b16 %v563, %v561
    %v580 = vpack.c.b16 %v564, %v562
    %597 = vmatprep.subr.bf16.mxu0 %v580
    %598 = vmatpush1.bf16.msra.mxu0 %v579
    %599 = vmatprep.subr.bf16.mxu0 %v578
    %600 = vmatpush1.bf16.msra.mxu0 %v577
    %601 = vmatprep.subr.bf16.mxu0 %v576
    %602 = vmatpush1.bf16.msra.mxu0 %v575
    %603 = vmatprep.subr.bf16.mxu0 %v574
    %604 = vmatpush1.bf16.msra.mxu0 %v573
    %605 = vmatprep.subr.bf16.mxu0 %v572
    %606 = vmatpush1.bf16.msra.mxu0 %v571
    %607 = vmatprep.subr.bf16.mxu0 %v570
    %608 = vmatpush1.bf16.msra.mxu0 %v569
    %609 = vmatprep.subr.bf16.mxu0 %v568
    %610 = vmatpush1.bf16.msra.mxu0 %v567
    %611 = vmatprep.subr.bf16.mxu0 %v566
    %612 = vmatpush1.bf16.msra.mxu0 %v565
    %613 = vmatprep.subr.bf16.mxu0 0
    %614 = vmatpush2.bf16.msra.mxu0 0
    %615 = vmatprep.subr.bf16.mxu0 0
    %616 = vmatpush2.bf16.msra.mxu0 0
    %617 = vmatprep.subr.bf16.mxu0 0
    %618 = vmatpush2.bf16.msra.mxu0 0
    %619 = vmatprep.subr.bf16.mxu0 0
    %620 = vmatpush2.bf16.msra.mxu0 0
    %621 = vmatprep.subr.bf16.mxu0 0
    %622 = vmatpush2.bf16.msra.mxu0 0
    %623 = vmatprep.subr.bf16.mxu0 0
    %624 = vmatpush2.bf16.msra.mxu0 0
    %625 = vmatprep.subr.bf16.mxu0 0
    %626 = vmatpush2.bf16.msra.mxu0 0
    %627 = vmatprep.subr.bf16.mxu0 0
    %628 = vmatpush2.bf16.msra.mxu0 0
    %629 = vmatprep.mubr.bf16.mxu0 0
    %630 = vmatmul.mubr.bf16.gmra.mxu0 %v499
    %v631 = vpop.f32.mrf.mxu0
    %v632 = vadd.f32 0.0, %v631
    %v633 = vpop.f32.mrf.mxu0
    %v634 = vadd.f32 0.0, %v633
    %v635 = vpop.f32.mrf.mxu0
    %v636 = vadd.f32 0.0, %v635
    %v637 = vpop.f32.mrf.mxu0
    %v638 = vadd.f32 0.0, %v637
    %639 = vdwg.mxu0
    %v640 = vpack.c.bf16 %v636, %v632
    %641 = vmatprep.subr.bf16.mxu0 0
    %642 = vmatpush1.bf16.msra.mxu0 0
    %643 = vmatprep.subr.bf16.mxu0 0
    %644 = vmatpush1.bf16.msra.mxu0 0
    %645 = vmatprep.subr.bf16.mxu0 0
    %646 = vmatpush1.bf16.msra.mxu0 0
    %647 = vmatprep.subr.bf16.mxu0 0
    %648 = vmatpush1.bf16.msra.mxu0 0
    %649 = vmatprep.subr.bf16.mxu0 0
    %650 = vmatpush1.bf16.msra.mxu0 0
    %651 = vmatprep.subr.bf16.mxu0 0
    %652 = vmatpush1.bf16.msra.mxu0 0
    %653 = vmatprep.subr.bf16.mxu0 0
    %654 = vmatpush1.bf16.msra.mxu0 0
    %655 = vmatprep.subr.bf16.mxu0 0
    %656 = vmatpush1.bf16.msra.mxu0 %v640
    %657 = vmatprep.subr.bf16.mxu0 0
    %658 = vmatpush2.bf16.msra.mxu0 0
    %659 = vmatprep.subr.bf16.mxu0 0
    %660 = vmatpush2.bf16.msra.mxu0 0
    %661 = vmatprep.subr.bf16.mxu0 0
    %662 = vmatpush2.bf16.msra.mxu0 0
    %663 = vmatprep.subr.bf16.mxu0 0
    %664 = vmatpush2.bf16.msra.mxu0 0
    %665 = vmatprep.subr.bf16.mxu0 0
    %666 = vmatpush2.bf16.msra.mxu0 0
    %667 = vmatprep.subr.bf16.mxu0 0
    %668 = vmatpush2.bf16.msra.mxu0 0
    %669 = vmatprep.subr.bf16.mxu0 0
    %670 = vmatpush2.bf16.msra.mxu0 0
    %671 = vmatprep.subr.bf16.mxu0 0
    %672 = vmatpush2.bf16.msra.mxu0 0
    %673 = vmatprep.mubr.bf16.mxu0 0
    %674 = vmatmul.mubr.bf16.gmra.mxu0 %v235
    %v675 = vpop.f32.mrf.mxu0
    %v676 = vadd.f32 0.0, %v675
    %v677 = vpop.f32.mrf.mxu0
    %v678 = vpop.f32.mrf.mxu0
    %v679 = vadd.f32 0.0, %v678
    %v680 = vpop.f32.mrf.mxu0
    %681 = vdwg.mxu0
    %v682 = vmul.f32 %v676, %v281
    %v683 = vmul.f32 %v679, %v286
    %v684 = vadd.f32 %v682, %v634
    %v685 = vadd.f32 %v683, %v638
    %v687 = vlaneseq
    %v688 = vshrl.u32 %v687, 7
    %v689 = vsub.s32 0, %v688
    %v690 = vrot.slane %v516, %v689
    %v692 = vadd.f32 %v684, %v690
    %v693 = vadd.f32 %v685, %v690
    %v694 = vlaneseq
    %v695 = vand.u32 %v694, 127
    %vm696 = vcmp.lt.s32.totalorder %v695, 8
    %v697 = vsel %vm696, %v692, -1e+30
    %v698 = vsel %vm696, %v693, -1e+30
    %699 = vmax.xlane.f32.xlu0 %v697
    %v700 = vpop.xlane.xlu0 %699
    %701 = vmax.xlane.f32.xlu0 %v698
    %v702 = vpop.xlane.xlu0 %701
    %v703 = vsub.f32 %v697, %v700
    %v704 = vsub.f32 %v698, %v702
    %v705 = vmul.f32 %v703, 1.442695
    %v706 = vpow.pop %v705
    %v707 = vmul.f32 %v704, 1.442695
    %v708 = vpow.pop %v707
    %709 = vadd.xlane.f32.xlu0 %v706
    %v710 = vpop.xlane.xlu0 %709
    %711 = vadd.xlane.f32.xlu0 %v708
    %v712 = vpop.xlane.xlu0 %711
    %v713 = vlog2.pop %v710
    %v714 = vmul.f32 %v713, 0.6931472
    %v715 = vlog2.pop %v712
    %v716 = vmul.f32 %v715, 0.6931472
    %v717 = vsub.f32 %v703, %v714
    %v718 = vsub.f32 %v704, %v716
    %719 = vst [vmem:[#allocation8] sm:$0xff] %v717
    %720 = vst [vmem:[#allocation8 + $0x8] sm:$0xff] %v718
    // Predicated region
    $region50: #{tpu_custom_call.1} parent=1 // pred_check
      _
    $region51: #{tpu_custom_call.1} parent=1 // pred_check_branch
      %722 = sbr.rel (0) target = $region53
    $region52: #{tpu_custom_call.1} parent=1 // pred_region
      %s724 = ssub.s32 256, 256
      %725 = vsyncadd [#allocation4], %s724
      %s726 = sshll.u32 [#allocation8], 4
      %s727 = int_to_ptr.vmem [resolvable:$true] %s726
      %732 = dma.vmem_to_hbm [thread:$0]  %s727, 256, %s9, [#allocation4], 128, 128, 8
    $region53: #{tpu_custom_call.1} parent=1 // pred_fallthru
      _
    // Predicated region
    $region54: #{tpu_custom_call.1} parent=1 // pred_check
      _
    $region55: #{tpu_custom_call.1} parent=1 // pred_check_branch
      %734 = sbr.rel (0) target = $region57
    $region56: #{tpu_custom_call.1} parent=1 // pred_region
      %735 = dma.done [#allocation4], 256
    $region57: #{tpu_custom_call.1} parent=1 // pred_fallthru
      _
    %736 = vsyncpa [#allocation3], 1
    %737 = vsyncpa [#allocation6], 1
    %738 = vsyncpa [#allocation4], 1

</llo_original>
